<compile_context>
chip_gen: v7x
topology: tpu7x:2x2x1
jax: 0.10.0
libtpu: 0.0.40
codegen_flags: <defaults>
</compile_context>

<pallas_src>
import functools

import jax
import jax.numpy as jnp
from jax.experimental import pallas as pl
from jax.experimental.pallas import tpu as pltpu


def _gap_kernel(x_ref, o_ref, acc_ref, *, inv_hw):
    """x_ref: (row_tile, h_tile, W) tile; o_ref: (row_tile, 1); acc_ref: f32 scratch."""
    k = pl.program_id(1)  # reduction axis over H tiles (last grid axis, "arbitrary")

    @pl.when(k == 0)
    def _init():
        acc_ref[...] = jnp.zeros_like(acc_ref)

    # Fused widen: accumulate in float32 without materializing an up-cast tile.
    part = jnp.sum(x_ref[...], axis=-1, dtype=jnp.float32)      # (row_tile, h_tile)
    acc_ref[...] += jnp.sum(part, axis=-1, keepdims=True)        # (row_tile, 1)

    @pl.when(k == pl.num_programs(1) - 1)
    def _finalize():
        o_ref[...] = (acc_ref[...] * inv_hw).astype(o_ref.dtype)


def _choose_tiles(rows: int, h: int, w: int, itemsize: int):
    """Pick (row_tile, h_tile) targeting ~4 MiB of lane-padded VMEM per input block."""
    target = 4 * 1024 * 1024                      # padded bytes per block (x2 double-buffer)
    w_pad = pl.cdiv(w, 128) * 128                 # lane padding actually held in VMEM
    slab = h * w_pad * itemsize                   # one full (H, W) slab, VMEM-padded

    # Output block (row_tile, 1) needs row_tile % 8 == 0 or row_tile == rows.
    min_rt = rows if rows <= 8 else 8

    if min_rt * slab <= target:
        # Common case: full H per block, tile rows only.
        h_tile = h
        row_tile = (target // slab) // 8 * 8
        row_tile = max(min_rt, min(row_tile, rows))
        if rows >= 16:
            # v7x: guarantee >= 2 (roughly balanced) steps on the parallel row axis
            # so both TensorCores stream their own share of HBM.
            balanced = max(8, ((pl.cdiv(rows, 2) + 7) // 8) * 8)
            row_tile = min(row_tile, balanced)
    else:
        # Huge spatial maps: split H with a multiple-of-8 divisor that fits the budget.
        row_tile = min_rt
        per_h_row = w_pad * itemsize
        budget_h = max(8, (target // (row_tile * per_h_row)) // 8 * 8)
        h_tile = None
        cand = min((h // 8) * 8, budget_h)
        while cand >= 8:
            if h % cand == 0:
                h_tile = cand
                break
            cand -= 8
        if h_tile is None:
            # TODO(synk): add in-kernel masking for ragged H tiles; for now fall back
            # to full-H blocks when H has no multiple-of-8 divisor under the budget.
            h_tile = h
    return row_tile, h_tile


def global_avg_pool2d(x: jax.Array) -> jax.Array:
    """Pallas equivalent of GlobalAvgPool2d.forward: mean over H, W -> (N, C, 1, 1)."""
    n, c, h, w = x.shape
    rows = n * c
    itemsize = jnp.dtype(x.dtype).itemsize

    # Leading-dim-only collapse: free metadata reshape, never an HBM relayout.
    x3 = x.reshape(rows, h, w)

    row_tile, h_tile = _choose_tiles(rows, h, w, itemsize)
    grid = (pl.cdiv(rows, row_tile), h // h_tile)  # reduction axis (H tiles) last

    kernel = functools.partial(_gap_kernel, inv_hw=float(1.0 / (h * w)))

    cost = pl.CostEstimate(
        flops=rows * h * w,                      # ~one add per input element
        transcendentals=0,
        bytes_accessed=rows * h * w * itemsize + rows * itemsize,
    )

    out = pl.pallas_call(
        kernel,
        out_shape=jax.ShapeDtypeStruct((rows, 1), x.dtype),
        grid_spec=pltpu.PrefetchScalarGridSpec(
            num_scalar_prefetch=0,
            grid=grid,
            in_specs=[pl.BlockSpec((row_tile, h_tile, w), lambda i, k: (i, k, 0))],
            out_specs=pl.BlockSpec((row_tile, 1), lambda i, k: (i, 0)),
            scratch_shapes=[pltpu.VMEM((row_tile, 1), jnp.float32)],
        ),
        compiler_params=pltpu.CompilerParams(
            dimension_semantics=("parallel", "arbitrary"),
        ),
        cost_estimate=cost,
    )(x3)

    return out.reshape(n, c, 1, 1)


if __name__ == "__main__":
    key = jax.random.PRNGKey(0)
    # Small NCHW input consistent with typical conv feature maps.
    x = jax.random.normal(key, (2, 4, 16, 16), dtype=jnp.float32)

    y = global_avg_pool2d(x)
    y = jax.block_until_ready(y)

    # Reference: mean over spatial dims, kept as (N, C, 1, 1) like avg_pool2d.
    y_ref = jnp.mean(x, axis=(2, 3), keepdims=True)
    assert y.shape == (2, 4, 1, 1)
    assert y.dtype == x.dtype
    assert jnp.allclose(y, y_ref, rtol=1e-6, atol=1e-6)

    print("KERNEL_OK")
</pallas_src>

<mosaic_0001>
module attributes {stable_mosaic.version = 11 : i64} {
  func.func @_gap_kernel(%arg0: i32, %arg1: i32, %arg2: memref<8x16x16xf32, #tpu.memory_space<vmem>>, %arg3: memref<8x1xf32, #tpu.memory_space<vmem>>, %arg4: memref<8x1xf32, #tpu.memory_space<vmem>>) attributes {dimension_semantics = [#tpu.dimension_semantics<parallel>, #tpu.dimension_semantics<arbitrary>], iteration_bounds = array<i64: 1, 1>, scalar_prefetch = 0 : i64, scratch_operands = 1 : i64, tpu.core_type = #tpu.core_type<tc>, window_params = [{transform_indices = @transform_0, window_bounds = array<i64: 8, 16, 16>}, {transform_indices = @transform_1, window_bounds = array<i64: 8, 1>}]} {
    %c0_i32 = arith.constant 0 : i32
    %0 = arith.cmpi eq, %arg1, %c0_i32 : i32
    %1 = arith.extui %0 : i1 to i32
    %c0_i32_0 = arith.constant 0 : i32
    %2 = arith.cmpi ne, %1, %c0_i32_0 : i32
    scf.if %2 {
      %cst_10 = arith.constant 0.000000e+00 : f32
      %13 = vector.broadcast %cst_10 : f32 to vector<8x1xf32>
      %c0_11 = arith.constant 0 : index
      %c0_12 = arith.constant 0 : index
      %14 = vector.load %arg4[%c0_11, %c0_12] : memref<8x1xf32, #tpu.memory_space<vmem>>, vector<8x1xf32>
      tpu.vector_store %arg4[%c0_11, %c0_12], %13 {strides = array<i32>} : memref<8x1xf32, #tpu.memory_space<vmem>>, vector<8x1xf32>,
    } else {
    }
    %c0 = arith.constant 0 : index
    %c0_1 = arith.constant 0 : index
    %c0_2 = arith.constant 0 : index
    %3 = vector.load %arg2[%c0, %c0_1, %c0_2] : memref<8x16x16xf32, #tpu.memory_space<vmem>>, vector<8x16x16xf32>
    %cst = arith.constant dense<0.000000e+00> : vector<8x16xf32>
    %4 = vector.multi_reduction <add>, %3, %cst [2] : vector<8x16x16xf32> to vector<8x16xf32>
    %c0_3 = arith.constant 0 : index
    %c0_4 = arith.constant 0 : index
    %5 = vector.load %arg4[%c0_3, %c0_4] : memref<8x1xf32, #tpu.memory_space<vmem>>, vector<8x1xf32>
    %cst_5 = arith.constant dense<0.000000e+00> : vector<8xf32>
    %6 = vector.multi_reduction <add>, %4, %cst_5 [1] : vector<8x16xf32> to vector<8xf32>
    %7 = vector.shape_cast %6 : vector<8xf32> to vector<8x1xf32>
    %8 = arith.addf %5, %7 : vector<8x1xf32>
    %c0_6 = arith.constant 0 : index
    %c0_7 = arith.constant 0 : index
    %9 = vector.load %arg4[%c0_6, %c0_7] : memref<8x1xf32, #tpu.memory_space<vmem>>, vector<8x1xf32>
    tpu.vector_store %arg4[%c0_6, %c0_7], %8 {strides = array<i32>} : memref<8x1xf32, #tpu.memory_space<vmem>>, vector<8x1xf32>,
    %c0_i32_8 = arith.constant 0 : i32
    %10 = arith.cmpi eq, %arg1, %c0_i32_8 : i32
    %11 = arith.extui %10 : i1 to i32
    %c0_i32_9 = arith.constant 0 : i32
    %12 = arith.cmpi ne, %11, %c0_i32_9 : i32
    scf.if %12 {
      %c0_10 = arith.constant 0 : index
      %c0_11 = arith.constant 0 : index
      %13 = vector.load %arg4[%c0_10, %c0_11] : memref<8x1xf32, #tpu.memory_space<vmem>>, vector<8x1xf32>
      %cst_12 = arith.constant 3.906250e-03 : f32
      %14 = vector.broadcast %cst_12 : f32 to vector<8x1xf32>
      %15 = arith.mulf %13, %14 : vector<8x1xf32>
      %c0_13 = arith.constant 0 : index
      %c0_14 = arith.constant 0 : index
      %16 = vector.load %arg3[%c0_13, %c0_14] : memref<8x1xf32, #tpu.memory_space<vmem>>, vector<8x1xf32>
      tpu.vector_store %arg3[%c0_13, %c0_14], %15 {strides = array<i32>} : memref<8x1xf32, #tpu.memory_space<vmem>>, vector<8x1xf32>,
    } else {
    }
    return
  }
  func.func @transform_0(%arg0: i32, %arg1: i32) -> (i32, i32, i32) {
    %c0_i32 = arith.constant 0 : i32
    %c0_i32_0 = arith.constant 0 : i32
    return %arg0, %arg1, %c0_i32 : i32, i32, i32
  }
  func.func @transform_1(%arg0: i32, %arg1: i32) -> (i32, i32) {
    %c0_i32 = arith.constant 0 : i32
    %c0_i32_0 = arith.constant 0 : i32
    return %arg0, %c0_i32 : i32, i32
  }
}

</mosaic_0001>

<llo_original>
// kernel: tpu_custom_call.1
$region0: #{tpu_custom_call.1}
  #allocation0 [shape = 'u32[]', space=smem, size = 0x4, offset = 0x4, fixed_abs, tag = 'smem constant byte address 0x4 - core index']
  #allocation1 [shape = 'u32[144,128]{1,0:T(1,128)}', space=vmem, size = 0x12000, scoped, tag = 'internal scratch']
  #allocation2 [shape = 'f32[8,1]{1,0:T(8,128)}', space=vmem, size = 0x1000, scoped, tag = 'scratch operand']
  %s0 = inlined_call_operand.hbm [shape: f32[8,16,16], index: 0, kind: input, shape index: {}]
  %s1 = inlined_call_operand.vmem [shape: f32[8,1], index: 1, kind: output, shape index: {}]
  %s2 = sld [smem:[#allocation0]]
  $region26: #{tpu_custom_call.1} parent=0
    _
  %s4 = ssub.s32 1, %s2
  %s5 = scalar_select 0, %s4, %s2
  $region1: #{tpu_custom_call.1} parent=0
    #allocation3 [shape = 'u8[65536]{0}', space=vmem, size = 0x10000, scoped, tag = 'input window, operand 0, single buffered']
    #allocation4 [shape = 's32[1]{0}', space=sflag, size = 0x4, scoped, tag = 'scoped memory for tpu_custom_call.1']
    %6 = vsyncpa [#allocation4], 0
    // Predicated region
    $region2: #{tpu_custom_call.1} parent=1 // pred_check
      _
    $region3: #{tpu_custom_call.1} parent=1 // pred_check_branch
      %8 = sbr.rel (0) target = $region5
    $region4: #{tpu_custom_call.1} parent=1 // pred_region
      %s10 = ssub.s32 2048, 2048
      %11 = vsyncadd [#allocation4], %s10
      %s12 = sshll.u32 [#allocation3], 4
      %s13 = int_to_ptr.vmem [resolvable:$true] %s12
      %18 = dma.hbm_to_vmem [thread:$0]  %s0, 2048, %s13, [#allocation4], 128, 128, 8
    $region5: #{tpu_custom_call.1} parent=1 // pred_fallthru
      _
    // Predicated region
    $region6: #{tpu_custom_call.1} parent=1 // pred_check
      _
    $region7: #{tpu_custom_call.1} parent=1 // pred_check_branch
      %20 = sbr.rel (0) target = $region9
    $region8: #{tpu_custom_call.1} parent=1 // pred_region
      %21 = dma.done [#allocation4], 2048
    $region9: #{tpu_custom_call.1} parent=1 // pred_fallthru
      _
    %p22 = scmp.eq.s32.totalorder 0, 0
    // Predicated region
    $region10: #{tpu_custom_call.1} parent=1 // pred_check
      %p23 = pneg %p22
    $region11: #{tpu_custom_call.1} parent=1 // pred_check_branch
      %25 = sbr.rel (%p23) target = $region13
    $region12: #{tpu_custom_call.1} parent=1 // pred_region
      %vm26 = vcmask 7168
      %27 = vst.msk [vmem:[#allocation2] sm:$0xff] %vm26, 0.0
    $region13: #{tpu_custom_call.1} parent=1 // pred_fallthru
      _
    %v28 = vld [vmem:[#allocation3] sm:$0xff]
    %v29 = vld [vmem:[#allocation3 + $0x8] sm:$0xff]
    %v30 = vld [vmem:[#allocation3 + $0x10] sm:$0xff]
    %v31 = vld [vmem:[#allocation3 + $0x18] sm:$0xff]
    %v32 = vld [vmem:[#allocation3 + $0x20] sm:$0xff]
    %v33 = vld [vmem:[#allocation3 + $0x28] sm:$0xff]
    %v34 = vld [vmem:[#allocation3 + $0x30] sm:$0xff]
    %v35 = vld [vmem:[#allocation3 + $0x38] sm:$0xff]
    %v36 = vld [vmem:[#allocation3 + $0x40] sm:$0xff]
    %v37 = vld [vmem:[#allocation3 + $0x48] sm:$0xff]
    %v38 = vld [vmem:[#allocation3 + $0x50] sm:$0xff]
    %v39 = vld [vmem:[#allocation3 + $0x58] sm:$0xff]
    %v40 = vld [vmem:[#allocation3 + $0x60] sm:$0xff]
    %v41 = vld [vmem:[#allocation3 + $0x68] sm:$0xff]
    %v42 = vld [vmem:[#allocation3 + $0x70] sm:$0xff]
    %v43 = vld [vmem:[#allocation3 + $0x78] sm:$0xff]
    %vm44 = vcmask 130048
    %v45 = vsel %vm44, %v28, 0.0
    %46 = vadd.xlane.f32.xlu0 %v45
    %v47 = vpop.xlane.xlu0 %46
    %v48 = vsel %vm44, %v29, 0.0
    %49 = vadd.xlane.f32.xlu0 %v48
    %v50 = vpop.xlane.xlu0 %49
    %v51 = vsel %vm44, %v30, 0.0
    %52 = vadd.xlane.f32.xlu0 %v51
    %v53 = vpop.xlane.xlu0 %52
    %v54 = vsel %vm44, %v31, 0.0
    %55 = vadd.xlane.f32.xlu0 %v54
    %v56 = vpop.xlane.xlu0 %55
    %v57 = vsel %vm44, %v32, 0.0
    %58 = vadd.xlane.f32.xlu0 %v57
    %v59 = vpop.xlane.xlu0 %58
    %v60 = vsel %vm44, %v33, 0.0
    %61 = vadd.xlane.f32.xlu0 %v60
    %v62 = vpop.xlane.xlu0 %61
    %v63 = vsel %vm44, %v34, 0.0
    %64 = vadd.xlane.f32.xlu0 %v63
    %v65 = vpop.xlane.xlu0 %64
    %v66 = vsel %vm44, %v35, 0.0
    %67 = vadd.xlane.f32.xlu0 %v66
    %v68 = vpop.xlane.xlu0 %67
    %v69 = vsel %vm44, %v36, 0.0
    %70 = vadd.xlane.f32.xlu0 %v69
    %v71 = vpop.xlane.xlu0 %70
    %v72 = vsel %vm44, %v37, 0.0
    %73 = vadd.xlane.f32.xlu0 %v72
    %v74 = vpop.xlane.xlu0 %73
    %v75 = vsel %vm44, %v38, 0.0
    %76 = vadd.xlane.f32.xlu0 %v75
    %v77 = vpop.xlane.xlu0 %76
    %v78 = vsel %vm44, %v39, 0.0
    %79 = vadd.xlane.f32.xlu0 %v78
    %v80 = vpop.xlane.xlu0 %79
    %v81 = vsel %vm44, %v40, 0.0
    %82 = vadd.xlane.f32.xlu0 %v81
    %v83 = vpop.xlane.xlu0 %82
    %v84 = vsel %vm44, %v41, 0.0
    %85 = vadd.xlane.f32.xlu0 %v84
    %v86 = vpop.xlane.xlu0 %85
    %v87 = vsel %vm44, %v42, 0.0
    %88 = vadd.xlane.f32.xlu0 %v87
    %v89 = vpop.xlane.xlu0 %88
    %v90 = vsel %vm44, %v43, 0.0
    %91 = vadd.xlane.f32.xlu0 %v90
    %v92 = vpop.xlane.xlu0 %91
    %v93 = vld [vmem:[#allocation2] sm:$0xff]
    %v110 = vlaneseq
    %v111 = vand.u32 %v110, 127
    %v112 = vlaneseq
    %v113 = vshrl.u32 %v112, 7
    %v114 = vsub.s32 %v111, %v113
    %v115 = vrot.slane %v47, %v114
    %v116 = vadd.s32 %v111, 4294967288
    %v117 = vlaneseq
    %v118 = vshrl.u32 %v117, 7
    %v119 = vsub.s32 %v116, %v118
    %v120 = vrot.slane %v50, %v119
    %vm121 = vcmask 130112
    %v122 = vsel %vm121, %v120, %v115
    %v123 = vlaneseq
    %v124 = vshrl.u32 %v123, 7
    %v125 = vsub.s32 %v111, %v124
    %v126 = vrot.slane %v53, %v125
    %v127 = vlaneseq
    %v128 = vshrl.u32 %v127, 7
    %v129 = vsub.s32 %v116, %v128
    %v130 = vrot.slane %v56, %v129
    %v131 = vsel %vm121, %v130, %v126
    %v132 = vlaneseq
    %v133 = vshrl.u32 %v132, 7
    %v134 = vsub.s32 %v111, %v133
    %v135 = vrot.slane %v59, %v134
    %v136 = vlaneseq
    %v137 = vshrl.u32 %v136, 7
    %v138 = vsub.s32 %v116, %v137
    %v139 = vrot.slane %v62, %v138
    %v140 = vsel %vm121, %v139, %v135
    %v141 = vlaneseq
    %v142 = vshrl.u32 %v141, 7
    %v143 = vsub.s32 %v111, %v142
    %v144 = vrot.slane %v65, %v143
    %v145 = vlaneseq
    %v146 = vshrl.u32 %v145, 7
    %v147 = vsub.s32 %v116, %v146
    %v148 = vrot.slane %v68, %v147
    %v149 = vsel %vm121, %v148, %v144
    %v150 = vlaneseq
    %v151 = vshrl.u32 %v150, 7
    %v152 = vsub.s32 %v111, %v151
    %v153 = vrot.slane %v71, %v152
    %v154 = vlaneseq
    %v155 = vshrl.u32 %v154, 7
    %v156 = vsub.s32 %v116, %v155
    %v157 = vrot.slane %v74, %v156
    %v158 = vsel %vm121, %v157, %v153
    %v159 = vlaneseq
    %v160 = vshrl.u32 %v159, 7
    %v161 = vsub.s32 %v111, %v160
    %v162 = vrot.slane %v77, %v161
    %v163 = vlaneseq
    %v164 = vshrl.u32 %v163, 7
    %v165 = vsub.s32 %v116, %v164
    %v166 = vrot.slane %v80, %v165
    %v167 = vsel %vm121, %v166, %v162
    %v168 = vlaneseq
    %v169 = vshrl.u32 %v168, 7
    %v170 = vsub.s32 %v111, %v169
    %v171 = vrot.slane %v83, %v170
    %v172 = vlaneseq
    %v173 = vshrl.u32 %v172, 7
    %v174 = vsub.s32 %v116, %v173
    %v175 = vrot.slane %v86, %v174
    %v176 = vsel %vm121, %v175, %v171
    %v177 = vlaneseq
    %v178 = vshrl.u32 %v177, 7
    %v179 = vsub.s32 %v111, %v178
    %v180 = vrot.slane %v89, %v179
    %v181 = vlaneseq
    %v182 = vshrl.u32 %v181, 7
    %v183 = vsub.s32 %v116, %v182
    %v184 = vrot.slane %v92, %v183
    %v185 = vsel %vm121, %v184, %v180
    %vm186 = vcmask 1041409
    %v187 = vsel %vm186, %v131, %v122
    %vm188 = vcmask 1042434
    %v189 = vsel %vm188, %v140, %v187
    %vm190 = vcmask 1043459
    %v191 = vsel %vm190, %v149, %v189
    %vm192 = vcmask 1044484
    %v193 = vsel %vm192, %v158, %v191
    %vm194 = vcmask 1045509
    %v195 = vsel %vm194, %v167, %v193
    %vm196 = vcmask 1046534
    %v197 = vsel %vm196, %v176, %v195
    %vm198 = vcmask 1047559
    %v199 = vsel %vm198, %v185, %v197
    %v201 = vsel %vm44, %v199, 0.0
    %202 = vadd.xlane.f32.xlu0 %v201
    %v203 = vpop.xlane.xlu0 %202
    %v204 = vadd.f32 %v93, %v203
    %vm205 = vcmask 7168
    %206 = vst.msk [vmem:[#allocation2] sm:$0xff] %vm205, %v204
    // Predicated region
    $region14: #{tpu_custom_call.1} parent=1 // pred_check
      %p207 = pneg %p22
    $region15: #{tpu_custom_call.1} parent=1 // pred_check_branch
      %209 = sbr.rel (%p207) target = $region17
    $region16: #{tpu_custom_call.1} parent=1 // pred_region
      %v210 = vld [vmem:[#allocation2] sm:$0xff]
      %v211 = vmul.f32 %v210, 0.00390625
      %212 = vst.msk [vmem:[%s1] sm:$0xff] %vm205, %v211
    $region17: #{tpu_custom_call.1} parent=1 // pred_fallthru
      _
    // Predicated region
    $region18: #{tpu_custom_call.1} parent=1 // pred_check
      _
    $region19: #{tpu_custom_call.1} parent=1 // pred_check_branch
      %214 = sbr.rel (0) target = $region21
    $region20: #{tpu_custom_call.1} parent=1 // pred_region
      _
    $region21: #{tpu_custom_call.1} parent=1 // pred_fallthru
      _
    // Predicated region
    $region22: #{tpu_custom_call.1} parent=1 // pred_check
      _
    $region23: #{tpu_custom_call.1} parent=1 // pred_check_branch
      %216 = sbr.rel (0) target = $region25
    $region24: #{tpu_custom_call.1} parent=1 // pred_region
      _
    $region25: #{tpu_custom_call.1} parent=1 // pred_fallthru
      _
    %217 = vsyncpa [#allocation4], 1

</llo_original>
